<compile_context>
chip_gen: v6e
topology: v6e:2x2x1
jax: 0.10.0
libtpu: 0.0.40
codegen_flags: <defaults>
</compile_context>

<pallas_src>
import functools

import jax
import jax.numpy as jnp
from jax import lax
from jax.experimental import pallas as pl
from jax.experimental.pallas import tpu as pltpu


def _round_up(n, m):
    return (n + m - 1) // m * m


def _self_attention_kernel(x_ref, wqkv_ref, bqkv_ref, wo_ref, bo_ref, o_ref,
                           *, compute_dtype):
    bt, s, d = x_ref.shape
    a_pad = wo_ref.shape[0]
    d_pad = wo_ref.shape[1]
    cd = compute_dtype

    # Flatten (bt, S, D) -> (bt*S, D) rows for the projection matmuls.
    x = x_ref[...].reshape(bt * s, d)

    # Fused Q/K/V projection: one wide MXU matmul (rows, 3*A_pad).
    # The 1/sqrt(A) score scale is already folded into Wq / bq by the wrapper.
    qkv = jnp.dot(x.astype(cd), wqkv_ref[...].astype(cd),
                  preferred_element_type=jnp.float32) + bqkv_ref[...]
    qkv = qkv.reshape(bt, s, 3 * a_pad)
    q = qkv[:, :, 0 * a_pad:1 * a_pad]          # (bt, S, A_pad), lane-aligned slices
    k = qkv[:, :, 1 * a_pad:2 * a_pad]
    v = qkv[:, :, 2 * a_pad:3 * a_pad]

    # scores = (q * 1/sqrt(A)) @ k^T : contract last dims directly, batched over bt.
    scores = lax.dot_general(
        q.astype(cd), k.astype(cd),
        dimension_numbers=(((2,), (2,)), ((0,), (0,))),
        preferred_element_type=jnp.float32)      # (bt, S, S)

    # Numerically stable softmax, kept in f32 (VPU/EUP path; v5e has no bf16 VPU).
    m = jnp.max(scores, axis=-1, keepdims=True)
    p = jnp.exp(scores - m)
    denom = jnp.sum(p, axis=-1, keepdims=True)
    w = p * pl.reciprocal(denom, approx=True)    # EUP vrcp (otherwise-idle slot)

    # Context: weights @ v, batched, contracting the key axis.
    ctx = lax.dot_general(
        w.astype(cd), v.astype(cd),
        dimension_numbers=(((2,), (1,)), ((0,), (0,))),
        preferred_element_type=jnp.float32)      # (bt, S, A_pad)

    # Output projection to the (lane-dense) padded feature dim.
    out = jnp.dot(ctx.reshape(bt * s, a_pad).astype(cd), wo_ref[...].astype(cd),
                  preferred_element_type=jnp.float32) + bo_ref[...]
    o_ref[...] = out.reshape(bt, s, d_pad).astype(o_ref.dtype)


def _pick_batch_tile(B, S, rows_target=256):
    """Largest divisor of B whose bt*S stays near the row target, preferring
    to leave >=2 grid steps so v7x's two TensorCores both get work."""
    divs = [d for d in range(1, B + 1) if B % d == 0]
    cands = [d for d in divs if d * S <= max(rows_target, S)] or [1]
    multi = [d for d in cands if B // d >= 2]
    return max(multi) if multi else max(cands)


def self_attention(x, wq, bq, wk, bk, wv, bv, wo, bo, *, matmul_dtype=None):
    """x: (B, S, D). Weights in PyTorch layout (out, in); biases (out,).

    matmul_dtype: optional dtype (e.g. jnp.bfloat16) for MXU operands only
    (recommended on v6e/v7x); accumulation and softmax stay float32.
    """
    B, S, D = x.shape
    A = wq.shape[0]
    A_pad = _round_up(A, 128)      # lane-dense per-head chunk
    D_pad = _round_up(D, 128)      # lane-dense output feature dim
    f32 = jnp.float32
    cd = matmul_dtype if matmul_dtype is not None else x.dtype

    scale = 1.0 / (A ** 0.5)       # fold score scale into Wq / bq (free)

    def pad2(w_t, rows, cols):     # (in, out) weight, zero-padded
        buf = jnp.zeros((rows, cols), f32)
        return buf.at[:w_t.shape[0], :w_t.shape[1]].set(w_t.astype(f32))

    def pad1(b, cols):             # (1, out) bias, zero-padded
        buf = jnp.zeros((1, cols), f32)
        return buf.at[0, :b.shape[0]].set(b.astype(f32))

    # Fused, pre-transposed, padded QKV weight / bias.
    wqkv = jnp.concatenate(
        [pad2(wq.T * scale, D, A_pad), pad2(wk.T, D, A_pad), pad2(wv.T, D, A_pad)],
        axis=1).astype(cd)                                     # (D, 3*A_pad)
    bqkv = jnp.concatenate(
        [pad1(bq * scale, A_pad), pad1(bk, A_pad), pad1(bv, A_pad)],
        axis=1)                                                # (1, 3*A_pad) f32
    wo_t = pad2(wo.T, A_pad, D_pad).astype(cd)                 # (A_pad, D_pad)
    bo_p = pad1(bo, D_pad)                                     # (1, D_pad) f32

    bt = _pick_batch_tile(B, S)
    grid = (B // bt,)

    kernel = functools.partial(_self_attention_kernel, compute_dtype=cd)
    const2d = lambda r, c: pl.BlockSpec((r, c), lambda b: (0, 0))

    # NOTE: for large S the monolithic (S, S) scores dominate VMEM; there you
    # would raise vmem_limit_bytes (v6e) or switch to a KV-tiled online softmax
    # (v7x, 64 MiB VMEM). For these shapes the default budget is ample.
    out_padded = pl.pallas_call(
        kernel,
        out_shape=jax.ShapeDtypeStruct((B, S, D_pad), x.dtype),
        grid_spec=pltpu.PrefetchScalarGridSpec(
            num_scalar_prefetch=0,
            grid=grid,
            in_specs=[
                pl.BlockSpec((bt, S, D), lambda b: (b, 0, 0)),  # x batch tile
                const2d(D, 3 * A_pad),                          # fused Wqkv
                const2d(1, 3 * A_pad),                          # fused bias
                const2d(A_pad, D_pad),                          # Wo (padded)
                const2d(1, D_pad),                              # bo (padded)
            ],
            out_specs=pl.BlockSpec((bt, S, D_pad), lambda b: (b, 0, 0)),
        ),
        compiler_params=pltpu.CompilerParams(
            dimension_semantics=("parallel",)),
    )(x, wqkv, bqkv, wo_t, bo_p)

    # Strip lane padding (layout plumbing only).
    return out_padded[:, :, :D] if D_pad != D else out_padded


def _reference(x, wq, bq, wk, bk, wv, bv, wo, bo):
    q = x @ wq.T + bq
    k = x @ wk.T + bk
    v = x @ wv.T + bv
    scores = jnp.einsum("bqa,bka->bqk", q, k) / jnp.sqrt(jnp.float32(k.shape[-1]))
    w = jax.nn.softmax(scores, axis=-1)
    ctx = jnp.einsum("bqk,bka->bqa", w, v)
    return ctx @ wo.T + bo


if __name__ == "__main__":
    # Small shapes consistent with the module: batch=2, seq=8, input_dim=32, attention_dim=16
    B, S, D_in, A = 2, 8, 32, 16

    key = jax.random.PRNGKey(0)
    kx, kwq, kbq, kwk, kbk, kwv, kbv, kwo, kbo = jax.random.split(key, 9)

    x = jax.random.normal(kx, (B, S, D_in), dtype=jnp.float32)

    # Deterministic parameter init (PyTorch Linear layout: weight (out, in), bias (out,))
    def lin_init(kw, kb, out_f, in_f):
        bound = 1.0 / jnp.sqrt(jnp.float32(in_f))
        w = jax.random.uniform(kw, (out_f, in_f), minval=-bound, maxval=bound, dtype=jnp.float32)
        b = jax.random.uniform(kb, (out_f,), minval=-bound, maxval=bound, dtype=jnp.float32)
        return w, b

    wq, bq = lin_init(kwq, kbq, A, D_in)
    wk, bk = lin_init(kwk, kbk, A, D_in)
    wv, bv = lin_init(kwv, kbv, A, D_in)
    wo, bo = lin_init(kwo, kbo, D_in, A)

    out = self_attention(x, wq, bq, wk, bk, wv, bv, wo, bo)
    out = jax.block_until_ready(out)

    ref = _reference(x, wq, bq, wk, bk, wv, bv, wo, bo)
    assert out.shape == (B, S, D_in), out.shape
    # Tolerance loosened slightly vs. 1e-4 because of the approximate (EUP)
    # softmax-denominator reciprocal; matmuls/softmax still accumulate in f32.
    assert jnp.allclose(out, ref, atol=2e-3, rtol=2e-3), float(jnp.max(jnp.abs(out - ref)))

    print("KERNEL_OK")
</pallas_src>

<mosaic_0001>
module attributes {stable_mosaic.version = 11 : i64} {
  func.func @_self_attention_kernel(%arg0: i32, %arg1: memref<1x8x32xf32, #tpu.memory_space<vmem>>, %arg2: memref<32x384xf32, #tpu.memory_space<vmem>>, %arg3: memref<1x384xf32, #tpu.memory_space<vmem>>, %arg4: memref<128x128xf32, #tpu.memory_space<vmem>>, %arg5: memref<1x128xf32, #tpu.memory_space<vmem>>, %arg6: memref<1x8x128xf32, #tpu.memory_space<vmem>>) attributes {dimension_semantics = [#tpu.dimension_semantics<parallel>], iteration_bounds = array<i64: 2>, scalar_prefetch = 0 : i64, scratch_operands = 0 : i64, tpu.core_type = #tpu.core_type<tc>, window_params = [{transform_indices = @transform_0, window_bounds = array<i64: 1, 8, 32>}, {pipeline_mode = #tpu.pipeline_mode<synchronous>, transform_indices = @transform_1, window_bounds = array<i64: 32, 384>}, {pipeline_mode = #tpu.pipeline_mode<synchronous>, transform_indices = @transform_2, window_bounds = array<i64: 1, 384>}, {pipeline_mode = #tpu.pipeline_mode<synchronous>, transform_indices = @transform_3, window_bounds = array<i64: 128, 128>}, {pipeline_mode = #tpu.pipeline_mode<synchronous>, transform_indices = @transform_4, window_bounds = array<i64: 1, 128>}, {transform_indices = @transform_5, window_bounds = array<i64: 1, 8, 128>}]} {
    %c0 = arith.constant 0 : index
    %c0_0 = arith.constant 0 : index
    %c0_1 = arith.constant 0 : index
    %0 = vector.load %arg1[%c0, %c0_0, %c0_1] : memref<1x8x32xf32, #tpu.memory_space<vmem>>, vector<1x8x32xf32>
    %1 = vector.shape_cast %0 : vector<1x8x32xf32> to vector<8x32xf32>
    %c0_2 = arith.constant 0 : index
    %c0_3 = arith.constant 0 : index
    %2 = vector.load %arg2[%c0_2, %c0_3] : memref<32x384xf32, #tpu.memory_space<vmem>>, vector<32x384xf32>
    %cst = arith.constant dense<0.000000e+00> : vector<8x384xf32>
    %3 = tpu.matmul %1, %2, %cst {dimension_numbers = #tpu.dot_dimension_numbers<[1], [0], [0], [1], [0, 0, 1, 1], [], []>} : vector<8x32xf32>, vector<32x384xf32>, vector<8x384xf32> -> vector<8x384xf32>
    %c0_4 = arith.constant 0 : index
    %c0_5 = arith.constant 0 : index
    %4 = vector.load %arg3[%c0_4, %c0_5] : memref<1x384xf32, #tpu.memory_space<vmem>>, vector<1x384xf32>
    %5 = vector.broadcast %4 : vector<1x384xf32> to vector<8x384xf32>
    %6 = arith.addf %3, %5 : vector<8x384xf32>
    %7 = vector.shape_cast %6 : vector<8x384xf32> to vector<1x8x384xf32>
    %8 = vector.extract_strided_slice %7 {offsets = [0, 0, 0], sizes = [1, 8, 128], strides = [1, 1, 1]} : vector<1x8x384xf32> to vector<1x8x128xf32>
    %9 = vector.extract_strided_slice %7 {offsets = [0, 0, 128], sizes = [1, 8, 128], strides = [1, 1, 1]} : vector<1x8x384xf32> to vector<1x8x128xf32>
    %10 = vector.extract_strided_slice %7 {offsets = [0, 0, 256], sizes = [1, 8, 128], strides = [1, 1, 1]} : vector<1x8x384xf32> to vector<1x8x128xf32>
    %cst_6 = arith.constant dense<0.000000e+00> : vector<1x8x8xf32>
    %11 = tpu.matmul %8, %9, %cst_6 {dimension_numbers = #tpu.dot_dimension_numbers<[2], [2], [1], [1], [0, 0, 0, 1, 1, 1], [0], [0]>} : vector<1x8x128xf32>, vector<1x8x128xf32>, vector<1x8x8xf32> -> vector<1x8x8xf32>
    %cst_7 = arith.constant dense<0xFF800000> : vector<1x8xf32>
    %12 = vector.multi_reduction <maximumf>, %11, %cst_7 [2] : vector<1x8x8xf32> to vector<1x8xf32>
    %13 = vector.shape_cast %12 : vector<1x8xf32> to vector<1x8x1xf32>
    %14 = vector.broadcast %13 : vector<1x8x1xf32> to vector<1x8x8xf32>
    %15 = arith.subf %11, %14 : vector<1x8x8xf32>
    %16 = math.exp %15 : vector<1x8x8xf32>
    %cst_8 = arith.constant dense<0.000000e+00> : vector<1x8xf32>
    %17 = vector.multi_reduction <add>, %16, %cst_8 [2] : vector<1x8x8xf32> to vector<1x8xf32>
    %18 = vector.shape_cast %17 : vector<1x8xf32> to vector<1x8x1xf32>
    %19 = tpu.reciprocal %18 {approx = true} : vector<1x8x1xf32> -> vector<1x8x1xf32>
    %20 = vector.broadcast %19 : vector<1x8x1xf32> to vector<1x8x8xf32>
    %21 = arith.mulf %16, %20 : vector<1x8x8xf32>
    %cst_9 = arith.constant dense<0.000000e+00> : vector<1x8x128xf32>
    %22 = tpu.matmul %21, %10, %cst_9 {dimension_numbers = #tpu.dot_dimension_numbers<[2], [1], [1], [2], [0, 0, 0, 1, 1, 2], [0], [0]>} : vector<1x8x8xf32>, vector<1x8x128xf32>, vector<1x8x128xf32> -> vector<1x8x128xf32>
    %23 = vector.shape_cast %22 : vector<1x8x128xf32> to vector<8x128xf32>
    %c0_10 = arith.constant 0 : index
    %c0_11 = arith.constant 0 : index
    %24 = vector.load %arg4[%c0_10, %c0_11] : memref<128x128xf32, #tpu.memory_space<vmem>>, vector<128x128xf32>
    %cst_12 = arith.constant dense<0.000000e+00> : vector<8x128xf32>
    %25 = tpu.matmul %23, %24, %cst_12 {dimension_numbers = #tpu.dot_dimension_numbers<[1], [0], [0], [1], [0, 0, 1, 1], [], []>} : vector<8x128xf32>, vector<128x128xf32>, vector<8x128xf32> -> vector<8x128xf32>
    %c0_13 = arith.constant 0 : index
    %c0_14 = arith.constant 0 : index
    %26 = vector.load %arg5[%c0_13, %c0_14] : memref<1x128xf32, #tpu.memory_space<vmem>>, vector<1x128xf32>
    %27 = vector.broadcast %26 : vector<1x128xf32> to vector<8x128xf32>
    %28 = arith.addf %25, %27 : vector<8x128xf32>
    %29 = vector.shape_cast %28 : vector<8x128xf32> to vector<1x8x128xf32>
    %c0_15 = arith.constant 0 : index
    %c0_16 = arith.constant 0 : index
    %c0_17 = arith.constant 0 : index
    %30 = vector.load %arg6[%c0_15, %c0_16, %c0_17] : memref<1x8x128xf32, #tpu.memory_space<vmem>>, vector<1x8x128xf32>
    tpu.vector_store %arg6[%c0_15, %c0_16, %c0_17], %29 {strides = array<i32>} : memref<1x8x128xf32, #tpu.memory_space<vmem>>, vector<1x8x128xf32>,
    return
  }
  func.func @transform_0(%arg0: i32) -> (i32, i32, i32) {
    %c0_i32 = arith.constant 0 : i32
    %c0_i32_0 = arith.constant 0 : i32
    %c0_i32_1 = arith.constant 0 : i32
    return %arg0, %c0_i32, %c0_i32_0 : i32, i32, i32
  }
  func.func @transform_1(%arg0: i32) -> (i32, i32) {
    %c0_i32 = arith.constant 0 : i32
    %c0_i32_0 = arith.constant 0 : i32
    %c0_i32_1 = arith.constant 0 : i32
    return %c0_i32, %c0_i32_0 : i32, i32
  }
  func.func @transform_2(%arg0: i32) -> (i32, i32) {
    %c0_i32 = arith.constant 0 : i32
    %c0_i32_0 = arith.constant 0 : i32
    %c0_i32_1 = arith.constant 0 : i32
    return %c0_i32, %c0_i32_0 : i32, i32
  }
  func.func @transform_3(%arg0: i32) -> (i32, i32) {
    %c0_i32 = arith.constant 0 : i32
    %c0_i32_0 = arith.constant 0 : i32
    %c0_i32_1 = arith.constant 0 : i32
    return %c0_i32, %c0_i32_0 : i32, i32
  }
  func.func @transform_4(%arg0: i32) -> (i32, i32) {
    %c0_i32 = arith.constant 0 : i32
    %c0_i32_0 = arith.constant 0 : i32
    %c0_i32_1 = arith.constant 0 : i32
    return %c0_i32, %c0_i32_0 : i32, i32
  }
  func.func @transform_5(%arg0: i32) -> (i32, i32, i32) {
    %c0_i32 = arith.constant 0 : i32
    %c0_i32_0 = arith.constant 0 : i32
    %c0_i32_1 = arith.constant 0 : i32
    return %arg0, %c0_i32, %c0_i32_0 : i32, i32, i32
  }
}

</mosaic_0001>

<llo_original>
// kernel: tpu_custom_call.1
$region0: #{tpu_custom_call.1}
  #allocation0 [shape = 'u32[]', space=smem, size = 0x4, offset = 0x4, fixed_abs, tag = 'smem constant byte address 0x4 - core index']
  #allocation1 [shape = 'u32[144,128]{1,0:T(1,128)}', space=vmem, size = 0x12000, scoped, tag = 'internal scratch']
  %s0 = inlined_call_operand.hbm [shape: f32[2,8,32], index: 0, kind: input, shape index: {}]
  %s1 = inlined_call_operand.hbm [shape: f32[32,384], index: 1, kind: input, shape index: {}]
  %s2 = inlined_call_operand.vmem [shape: f32[1,384], index: 2, kind: input, shape index: {}]
  %s3 = inlined_call_operand.hbm [shape: f32[128,128], index: 3, kind: input, shape index: {}]
  %s4 = inlined_call_operand.vmem [shape: f32[1,128], index: 4, kind: input, shape index: {}]
  %s5 = inlined_call_operand.hbm [shape: f32[2,8,128], index: 5, kind: output, shape index: {}]
  %s6 = sld [smem:[#allocation0]]
  $region65: #{tpu_custom_call.1} parent=0
    _
  %s8 = ssub.s32 1, %s6
  %s9 = scalar_select 0, %s8, %s6
  $region1: #{tpu_custom_call.1} parent=0
    #allocation2 [shape = 'u8[8192]{0}', space=vmem, size = 0x2000, scoped, tag = 'input window, operand 0']
    #allocation3 [shape = 's32[2]{0}', space=sflag, size = 0x8, scoped, tag = 'scoped memory for tpu_custom_call.1']
    #allocation4 [shape = 's32[2]{0}', space=sflag, size = 0x8, scoped, tag = 'scoped memory for tpu_custom_call.1']
    #allocation5 [shape = 'u8[49152]{0}', space=vmem, size = 0xc000, scoped, tag = 'input window, operand 1, single buffered']
    #allocation6 [shape = 's32[1]{0}', space=sflag, size = 0x4, scoped, tag = 'scoped memory for tpu_custom_call.1']
    #allocation7 [shape = 'u8[65536]{0}', space=vmem, size = 0x10000, scoped, tag = 'input window, operand 3, single buffered']
    #allocation8 [shape = 'u8[8192]{0}', space=vmem, size = 0x2000, scoped, tag = 'output window, operand 0']
    %10 = vsyncpa [#allocation3], 0
    %s11 = scalar_lea.sflag [#allocation3], 1
    %12 = vsyncpa %s11, 0
    %13 = vsyncpa [#allocation6], 0
    %14 = vsyncpa [#allocation4], 0
    %s15 = scalar_lea.sflag [#allocation4], 1
    %16 = vsyncpa %s15, 0
    loop: start=0, step=1, limit=4
    $region2: #{tpu_custom_call.1} parent=1 // loop_pre_header
      _
    $region3: #{tpu_custom_call.1} parent=1 // loop_header
      %s18 = sphi 0, %s22
      %p19 = scmp.ge.s32.totalorder %s18, 4
      %s28 = sphi 0, %s30
      %s31 = sphi 0, %s28
      %s32 = sphi 0, %s31
      %s48 = sphi 0, %s32
      %s52 = sphi 0, %s52
      %s54 = sphi 0, %s52
      %s55 = sphi 0, %s54
      %s69 = sphi 0, %s55
      %s73 = sphi 0, %s73
      %s75 = sphi 0, %s73
      %s76 = sphi 0, %s75
      %s90 = sphi 0, %s76
      %s94 = sphi 0, %s94
      %s96 = sphi 0, %s94
      %s97 = sphi 0, %s96
      %s111 = sphi 0, %s97
      %s115 = sphi 0, %s115
      %s117 = sphi 0, %s115
      %s118 = sphi 0, %s117
      %s132 = sphi 0, %s118
      %s138 = sphi 0, %s140
      %s141 = sphi 0, %s138
      %s142 = sphi 0, %s141
      %s158 = sphi 0, %s142
    $region4: #{tpu_custom_call.1} parent=1 // loop_header_branch
      %21 = sbr.rel (%p19) target = $region8
    $region5: #{tpu_custom_call.1} parent=1 // loop_body
      %s23 = ssub.s32 %s18, 1
      %s24 = ssub.s32 %s18, 2
      %s25 = sadd.s32 %s18, 1
      %s26 = ssub.s32 %s18, %s25
      %p27 = scmp.eq.s32.totalorder %s26, 0
      %s29 = sadd.s32 %s28, 1
      %s30 = scalar_select %p27, %s28, %s29
      %p33 = pneg %p27
      %p34 = scmp.eq.s32.totalorder %s18, 1
      %p35 = por %p33, %p34
      %p36 = scmp.ne.s32.totalorder %s28, %s31
      %p37 = scmp.eq.s32.totalorder %s18, 0
      %p38 = por %p36, %p37
      %p39 = scmp.ne.s32.totalorder %s28, %s31
      %p40 = scmp.eq.s32.totalorder %s23, 1
      %p41 = por %p39, %p40
      %p42 = scmp.ne.s32.totalorder %s31, %s32
      %p43 = scmp.eq.s32.totalorder %s23, 0
      %p44 = por %p42, %p43
      %p45 = scmp.ne.s32.totalorder %s31, %s32
      %p46 = scmp.eq.s32.totalorder %s24, 1
      %p47 = por %p45, %p46
      %p49 = scmp.ne.s32.totalorder %s32, %s48
      %p50 = scmp.eq.s32.totalorder %s24, 0
      %p51 = por %p49, %p50
      %s53 = sadd.s32 %s52, 1
      %p56 = scmp.eq.s32.totalorder %s18, 1
      %p57 = scmp.ne.s32.totalorder %s52, %s54
      %p58 = scmp.eq.s32.totalorder %s18, 0
      %p59 = por %p57, %p58
      %p60 = scmp.ne.s32.totalorder %s52, %s54
      %p61 = scmp.eq.s32.totalorder %s23, 1
      %p62 = por %p60, %p61
      %p63 = scmp.ne.s32.totalorder %s54, %s55
      %p64 = scmp.eq.s32.totalorder %s23, 0
      %p65 = por %p63, %p64
      %p66 = scmp.ne.s32.totalorder %s54, %s55
      %p67 = scmp.eq.s32.totalorder %s24, 1
      %p68 = por %p66, %p67
      %p70 = scmp.ne.s32.totalorder %s55, %s69
      %p71 = scmp.eq.s32.totalorder %s24, 0
      %p72 = por %p70, %p71
      %s74 = sadd.s32 %s73, 1
      %p77 = scmp.eq.s32.totalorder %s18, 1
      %p78 = scmp.ne.s32.totalorder %s73, %s75
      %p79 = scmp.eq.s32.totalorder %s18, 0
      %p80 = por %p78, %p79
      %p81 = scmp.ne.s32.totalorder %s73, %s75
      %p82 = scmp.eq.s32.totalorder %s23, 1
      %p83 = por %p81, %p82
      %p84 = scmp.ne.s32.totalorder %s75, %s76
      %p85 = scmp.eq.s32.totalorder %s23, 0
      %p86 = por %p84, %p85
      %p87 = scmp.ne.s32.totalorder %s75, %s76
      %p88 = scmp.eq.s32.totalorder %s24, 1
      %p89 = por %p87, %p88
      %p91 = scmp.ne.s32.totalorder %s76, %s90
      %p92 = scmp.eq.s32.totalorder %s24, 0
      %p93 = por %p91, %p92
      %s95 = sadd.s32 %s94, 1
      %p98 = scmp.eq.s32.totalorder %s18, 1
      %p99 = scmp.ne.s32.totalorder %s94, %s96
      %p100 = scmp.eq.s32.totalorder %s18, 0
      %p101 = por %p99, %p100
      %p102 = scmp.ne.s32.totalorder %s94, %s96
      %p103 = scmp.eq.s32.totalorder %s23, 1
      %p104 = por %p102, %p103
      %p105 = scmp.ne.s32.totalorder %s96, %s97
      %p106 = scmp.eq.s32.totalorder %s23, 0
      %p107 = por %p105, %p106
      %p108 = scmp.ne.s32.totalorder %s96, %s97
      %p109 = scmp.eq.s32.totalorder %s24, 1
      %p110 = por %p108, %p109
      %p112 = scmp.ne.s32.totalorder %s97, %s111
      %p113 = scmp.eq.s32.totalorder %s24, 0
      %p114 = por %p112, %p113
      %s116 = sadd.s32 %s115, 1
      %p119 = scmp.eq.s32.totalorder %s18, 1
      %p120 = scmp.ne.s32.totalorder %s115, %s117
      %p121 = scmp.eq.s32.totalorder %s18, 0
      %p122 = por %p120, %p121
      %p123 = scmp.ne.s32.totalorder %s115, %s117
      %p124 = scmp.eq.s32.totalorder %s23, 1
      %p125 = por %p123, %p124
      %p126 = scmp.ne.s32.totalorder %s117, %s118
      %p127 = scmp.eq.s32.totalorder %s23, 0
      %p128 = por %p126, %p127
      %p129 = scmp.ne.s32.totalorder %s117, %s118
      %p130 = scmp.eq.s32.totalorder %s24, 1
      %p131 = por %p129, %p130
      %p133 = scmp.ne.s32.totalorder %s118, %s132
      %p134 = scmp.eq.s32.totalorder %s24, 0
      %p135 = por %p133, %p134
      %s136 = ssub.s32 %s18, %s25
      %p137 = scmp.eq.s32.totalorder %s136, 0
      %s139 = sadd.s32 %s138, 1
      %s140 = scalar_select %p137, %s138, %s139
      %p143 = pneg %p137
      %p144 = scmp.eq.s32.totalorder %s18, 1
      %p145 = por %p143, %p144
      %p146 = scmp.ne.s32.totalorder %s138, %s141
      %p147 = scmp.eq.s32.totalorder %s18, 0
      %p148 = por %p146, %p147
      %p149 = scmp.ne.s32.totalorder %s138, %s141
      %p150 = scmp.eq.s32.totalorder %s23, 1
      %p151 = por %p149, %p150
      %p152 = scmp.ne.s32.totalorder %s141, %s142
      %p153 = scmp.eq.s32.totalorder %s23, 0
      %p154 = por %p152, %p153
      %p155 = scmp.ne.s32.totalorder %s141, %s142
      %p156 = scmp.eq.s32.totalorder %s24, 1
      %p157 = por %p155, %p156
      %p159 = scmp.ne.s32.totalorder %s142, %s158
      %p160 = scmp.eq.s32.totalorder %s24, 0
      %p161 = por %p159, %p160
      %p162 = scmp.le.s32.totalorder 1, %s18
      %p163 = scmp.lt.s32.totalorder %s18, 3
      %p164 = pnand %p162, %p163
      %p165 = pneg %p164
      // Predicated region
      $region9: #{tpu_custom_call.1} parent=5 // pred_check
        _
      $region10: #{tpu_custom_call.1} parent=5 // pred_check_branch
        %167 = sbr.rel (%p164) target = $region12
      $region11: #{tpu_custom_call.1} parent=5 // pred_region
        %s168 = ssub.s32 %s18, 1
        // Predicated region
        $region13: #{tpu_custom_call.1} parent=11 // pred_check
          %p169 = pneg %p65
        $region14: #{tpu_custom_call.1} parent=11 // pred_check_branch
          %171 = sbr.rel (%p169) target = $region16
        $region15: #{tpu_custom_call.1} parent=11 // pred_region
          %s173 = ssub.s32 1536, 1536
          %174 = vsyncadd [#allocation6], %s173
          %s175 = sshll.u32 [#allocation5], 4
          %s176 = int_to_ptr.vmem [resolvable:$true] %s175
          %181 = dma.hbm_to_vmem [thread:$0]  %s1, 1536, %s176, [#allocation6], 384, 384, 24
        $region16: #{tpu_custom_call.1} parent=11 // pred_fallthru
          _
        // Predicated region
        $region17: #{tpu_custom_call.1} parent=11 // pred_check
          %p182 = pneg %p86
        $region18: #{tpu_custom_call.1} parent=11 // pred_check_branch
          %184 = sbr.rel (%p182) target = $region20
        $region19: #{tpu_custom_call.1} parent=11 // pred_region
          _
        $region20: #{tpu_custom_call.1} parent=11 // pred_fallthru
          _
        // Predicated region
        $region21: #{tpu_custom_call.1} parent=11 // pred_check
          %p185 = pneg %p107
        $region22: #{tpu_custom_call.1} parent=11 // pred_check_branch
          %187 = sbr.rel (%p185) target = $region24
        $region23: #{tpu_custom_call.1} parent=11 // pred_region
          %s189 = ssub.s32 2048, 2048
          %190 = vsyncadd [#allocation6], %s189
          %s191 = sshll.u32 [#allocation7], 4
          %s192 = int_to_ptr.vmem [resolvable:$true] %s191
          %197 = dma.hbm_to_vmem [thread:$0]  %s3, 2048, %s192, [#allocation6], 128, 128, 8
        $region24: #{tpu_custom_call.1} parent=11 // pred_fallthru
          _
        // Predicated region
        $region25: #{tpu_custom_call.1} parent=11 // pred_check
          %p198 = pneg %p128
        $region26: #{tpu_custom_call.1} parent=11 // pred_check_branch
          %200 = sbr.rel (%p198) target = $region28
        $region27: #{tpu_custom_call.1} parent=11 // pred_region
          _
        $region28: #{tpu_custom_call.1} parent=11 // pred_fallthru
          _
      $region12: #{tpu_custom_call.1} parent=5 // pred_fallthru
        _
      %p201 = scmp.lt.s32.totalorder %s18, 2
      // Predicated region
      $region29: #{tpu_custom_call.1} parent=5 // pred_check
        %p202 = pneg %p201
      $region30: #{tpu_custom_call.1} parent=5 // pred_check_branch
        %204 = sbr.rel (%p202) target = $region32
      $region31: #{tpu_custom_call.1} parent=5 // pred_region
        // Predicated region
        $region33: #{tpu_custom_call.1} parent=31 // pred_check
          %p205 = pneg %p38
        $region34: #{tpu_custom_call.1} parent=31 // pred_check_branch
          %207 = sbr.rel (%p205) target = $region36
        $region35: #{tpu_custom_call.1} parent=31 // pred_region
          %s208 = sand.u32 %s28, 1
          %s209 = scalar_lea.sflag [#allocation3], %s208
          %s210 = sand.u32 %s28, 1
          %s211 = smul.addr %s210, 8
          %s212 = scalar_lea.vmem [#allocation2], %s211
          %s214 = ssub.s32 128, 128
          %215 = vsyncadd %s209, %s214
          %s216 = smul.addr %s18, 128
          %s217 = scalar_lea.hbm %s0, %s216
          %s219 = sshll.u32 %s212, 4
          %s220 = int_to_ptr.vmem [resolvable:$true] %s219
          %222 = dma.hbm_to_vmem [thread:$0]  %s217, 128, %s220, %s209
        $region36: #{tpu_custom_call.1} parent=31 // pred_fallthru
          _
      $region32: #{tpu_custom_call.1} parent=5 // pred_fallthru
        _
      %p223 = scmp.le.s32.totalorder 1, %s18
      %p224 = scmp.lt.s32.totalorder %s18, 3
      %p225 = pnand %p223, %p224
      %p226 = pneg %p225
      // Predicated region
      $region37: #{tpu_custom_call.1} parent=5 // pred_check
        _
      $region38: #{tpu_custom_call.1} parent=5 // pred_check_branch
        %228 = sbr.rel (%p225) target = $region40
      $region39: #{tpu_custom_call.1} parent=5 // pred_region
        %s229 = ssub.s32 %s18, 1
        %s230 = sand.u32 %s31, 1
        %s231 = scalar_lea.sflag [#allocation3], %s230
        %s232 = sand.u32 %s31, 1
        %s233 = smul.addr %s232, 8
        %s234 = scalar_lea.vmem [#allocation2], %s233
        // Predicated region
        $region41: #{tpu_custom_call.1} parent=39 // pred_check
          %p235 = pneg %p44
        $region42: #{tpu_custom_call.1} parent=39 // pred_check_branch
          %237 = sbr.rel (%p235) target = $region44
        $region43: #{tpu_custom_call.1} parent=39 // pred_region
          %238 = dma.done %s231, 128
        $region44: #{tpu_custom_call.1} parent=39 // pred_fallthru
          _
        // Predicated region
        $region45: #{tpu_custom_call.1} parent=39 // pred_check
          %p239 = pneg %p65
        $region46: #{tpu_custom_call.1} parent=39 // pred_check_branch
          %241 = sbr.rel (%p239) target = $region48
        $region47: #{tpu_custom_call.1} parent=39 // pred_region
          %242 = dma.done [#allocation6], 1536
        $region48: #{tpu_custom_call.1} parent=39 // pred_fallthru
          _
        // Predicated region
        $region49: #{tpu_custom_call.1} parent=39 // pred_check
          %p243 = pneg %p107
        $region50: #{tpu_custom_call.1} parent=39 // pred_check_branch
          %245 = sbr.rel (%p243) target = $region52
        $region51: #{tpu_custom_call.1} parent=39 // pred_region
          %246 = dma.done [#allocation6], 2048
        $region52: #{tpu_custom_call.1} parent=39 // pred_fallthru
          _
        %s247 = sand.u32 %s31, 1
        %s248 = scalar_lea.sflag [#allocation3], %s247
        %s249 = sand.u32 %s31, 1
        %s250 = smul.addr %s249, 8
        %s251 = scalar_lea.vmem [#allocation2], %s250
        %p252 = pneg %p44
        %p253 = pneg %p41
        %p254 = pneg %p65
        %p255 = pneg %p62
        %p256 = pneg %p86
        %p257 = pneg %p83
        %p258 = pneg %p107
        %p259 = pneg %p104
        %p260 = pneg %p128
        %p261 = pneg %p125
        %p262 = pneg %p154
        %p263 = pneg %p151
        %s264 = sand.u32 %s141, 1
        %s265 = scalar_lea.sflag [#allocation4], %s264
        %s266 = sand.u32 %s141, 1
        %s267 = smul.addr %s266, 8
        %s268 = scalar_lea.vmem [#allocation8], %s267
        %v269 = vld [vmem:[%s234] sm:$0xff]
        %v270 = vld [vmem:[#allocation5] sm:$0xff]
        %v271 = vld [vmem:[#allocation5 + $0x8] sm:$0xff]
        %v272 = vld [vmem:[#allocation5 + $0x10] sm:$0xff]
        %v273 = vld [vmem:[#allocation5 + $0x18] sm:$0xff]
        %v274 = vld [vmem:[#allocation5 + $0x20] sm:$0xff]
        %v275 = vld [vmem:[#allocation5 + $0x28] sm:$0xff]
        %v276 = vld [vmem:[#allocation5 + $0x30] sm:$0xff]
        %v277 = vld [vmem:[#allocation5 + $0x38] sm:$0xff]
        %v278 = vld [vmem:[#allocation5 + $0x40] sm:$0xff]
        %v279 = vld [vmem:[#allocation5 + $0x48] sm:$0xff]
        %v280 = vld [vmem:[#allocation5 + $0x50] sm:$0xff]
        %v281 = vld [vmem:[#allocation5 + $0x58] sm:$0xff]
        %v282 = vld [vmem:[%s2] sm:$0x7]
        %v284 = vlaneseq
        %v285 = vshrl.u32 %v284, 7
        %v286 = vsub.s32 0, %v285
        %v287 = vrot.slane %v282, %v286
        %v288 = vlaneseq
        %v289 = vshrl.u32 %v288, 7
        %v290 = vsub.s32 1, %v289
        %v291 = vrot.slane %v282, %v290
        %v292 = vlaneseq
        %v293 = vshrl.u32 %v292, 7
        %v294 = vsub.s32 2, %v293
        %v295 = vrot.slane %v282, %v294
        %vm299 = vcmask 261120
        %v301 = vsel %vm299, %v269, 0
        %303 = vmatprep.subr.mxu0 0.0
        %304 = vmatpush1.msra.mxu0 0.0
        %305 = vmatprep.subr.mxu0 0.0
        %306 = vmatpush1.msra.mxu0 0.0
        %307 = vmatprep.subr.mxu0 0.0
        %308 = vmatpush1.msra.mxu0 0.0
        %309 = vmatprep.subr.mxu0 0.0
        %310 = vmatpush1.msra.mxu0 0.0
        %311 = vmatprep.subr.mxu0 0.0
        %312 = vmatpush1.msra.mxu0 0.0
        %313 = vmatprep.subr.mxu0 0.0
        %314 = vmatpush1.msra.mxu0 0.0
        %315 = vmatprep.subr.mxu0 0.0
        %316 = vmatpush1.msra.mxu0 0.0
        %317 = vmatprep.subr.mxu0 0.0
        %318 = vmatpush1.msra.mxu0 0.0
        %319 = vmatprep.subr.mxu0 0.0
        %320 = vmatpush1.msra.mxu0 0.0
        %321 = vmatprep.subr.mxu0 0.0
        %322 = vmatpush1.msra.mxu0 0.0
        %323 = vmatprep.subr.mxu0 0.0
        %324 = vmatpush1.msra.mxu0 0.0
        %325 = vmatprep.subr.mxu0 0.0
        %326 = vmatpush1.msra.mxu0 0.0
        %327 = vmatprep.subr.mxu0 %v280
        %328 = vmatpush1.msra.mxu0 %v279
        %329 = vmatprep.subr.mxu0 %v277
        %330 = vmatpush1.msra.mxu0 %v276
        %331 = vmatprep.subr.mxu0 %v274
        %332 = vmatpush1.msra.mxu0 %v273
        %333 = vmatprep.subr.mxu0 %v271
        %334 = vmatpush1.msra.mxu0 %v270
        %335 = vmatprep.subr.mxu0 0.0
        %336 = vmatpush2.msra.mxu0 0.0
        %337 = vmatprep.subr.mxu0 0.0
        %338 = vmatpush2.msra.mxu0 0.0
        %339 = vmatprep.subr.mxu0 0.0
        %340 = vmatpush2.msra.mxu0 0.0
        %341 = vmatprep.subr.mxu0 0.0
        %342 = vmatpush2.msra.mxu0 0.0
        %343 = vmatprep.subr.mxu0 0.0
        %344 = vmatpush2.msra.mxu0 0.0
        %345 = vmatprep.subr.mxu0 0.0
        %346 = vmatpush2.msra.mxu0 0.0
        %347 = vmatprep.subr.mxu0 0.0
        %348 = vmatpush2.msra.mxu0 0.0
        %349 = vmatprep.subr.mxu0 0.0
        %350 = vmatpush2.msra.mxu0 0.0
        %351 = vmatprep.subr.mxu0 0.0
        %352 = vmatpush2.msra.mxu0 0.0
        %353 = vmatprep.subr.mxu0 0.0
        %354 = vmatpush2.msra.mxu0 0.0
        %355 = vmatprep.subr.mxu0 0.0
        %356 = vmatpush2.msra.mxu0 0.0
        %357 = vmatprep.subr.mxu0 0.0
        %358 = vmatpush2.msra.mxu0 0.0
        %359 = vmatprep.subr.mxu0 0.0
        %360 = vmatpush2.msra.mxu0 0.0
        %361 = vmatprep.subr.mxu0 0.0
        %362 = vmatpush2.msra.mxu0 0.0
        %363 = vmatprep.subr.mxu0 0.0
        %364 = vmatpush2.msra.mxu0 0.0
        %365 = vmatprep.subr.mxu0 0.0
        %366 = vmatpush2.msra.mxu0 0.0
        %367 = vmatprep.mubr.f32.mxu0 0.0
        %368 = vmatmul.mubr.f32.gmra.mxu0 %v301
        %v369 = vpop.f32.mrf.mxu0
        %v370 = vadd.f32 %v287, %v369
        %v371 = vpop.f32.mrf.mxu0
        %v372 = vadd.f32 %v291, %v371
        %373 = vdwg.mxu0
        %374 = vmatprep.subr.mxu0 0.0
        %375 = vmatpush1.msra.mxu0 0.0
        %376 = vmatprep.subr.mxu0 0.0
        %377 = vmatpush1.msra.mxu0 0.0
        %378 = vmatprep.subr.mxu0 0.0
        %379 = vmatpush1.msra.mxu0 0.0
        %380 = vmatprep.subr.mxu0 0.0
        %381 = vmatpush1.msra.mxu0 0.0
        %382 = vmatprep.subr.mxu0 0.0
        %383 = vmatpush1.msra.mxu0 0.0
        %384 = vmatprep.subr.mxu0 0.0
        %385 = vmatpush1.msra.mxu0 0.0
        %386 = vmatprep.subr.mxu0 0.0
        %387 = vmatpush1.msra.mxu0 0.0
        %388 = vmatprep.subr.mxu0 0.0
        %389 = vmatpush1.msra.mxu0 0.0
        %390 = vmatprep.subr.mxu0 0.0
        %391 = vmatpush1.msra.mxu0 0.0
        %392 = vmatprep.subr.mxu0 0.0
        %393 = vmatpush1.msra.mxu0 0.0
        %394 = vmatprep.subr.mxu0 0.0
        %395 = vmatpush1.msra.mxu0 0.0
        %396 = vmatprep.subr.mxu0 0.0
        %397 = vmatpush1.msra.mxu0 0.0
        %398 = vmatprep.subr.mxu0 0.0
        %399 = vmatpush1.msra.mxu0 %v281
        %400 = vmatprep.subr.mxu0 0.0
        %401 = vmatpush1.msra.mxu0 %v278
        %402 = vmatprep.subr.mxu0 0.0
        %403 = vmatpush1.msra.mxu0 %v275
        %404 = vmatprep.subr.mxu0 0.0
        %405 = vmatpush1.msra.mxu0 %v272
        %406 = vmatprep.subr.mxu0 0.0
        %407 = vmatpush2.msra.mxu0 0.0
        %408 = vmatprep.subr.mxu0 0.0
        %409 = vmatpush2.msra.mxu0 0.0
        %410 = vmatprep.subr.mxu0 0.0
        %411 = vmatpush2.msra.mxu0 0.0
        %412 = vmatprep.subr.mxu0 0.0
        %413 = vmatpush2.msra.mxu0 0.0
        %414 = vmatprep.subr.mxu0 0.0
        %415 = vmatpush2.msra.mxu0 0.0
        %416 = vmatprep.subr.mxu0 0.0
        %417 = vmatpush2.msra.mxu0 0.0
        %418 = vmatprep.subr.mxu0 0.0
        %419 = vmatpush2.msra.mxu0 0.0
        %420 = vmatprep.subr.mxu0 0.0
        %421 = vmatpush2.msra.mxu0 0.0
        %422 = vmatprep.subr.mxu0 0.0
        %423 = vmatpush2.msra.mxu0 0.0
        %424 = vmatprep.subr.mxu0 0.0
        %425 = vmatpush2.msra.mxu0 0.0
        %426 = vmatprep.subr.mxu0 0.0
        %427 = vmatpush2.msra.mxu0 0.0
        %428 = vmatprep.subr.mxu0 0.0
        %429 = vmatpush2.msra.mxu0 0.0
        %430 = vmatprep.subr.mxu0 0.0
        %431 = vmatpush2.msra.mxu0 0.0
        %432 = vmatprep.subr.mxu0 0.0
        %433 = vmatpush2.msra.mxu0 0.0
        %434 = vmatprep.subr.mxu0 0.0
        %435 = vmatpush2.msra.mxu0 0.0
        %436 = vmatprep.subr.mxu0 0.0
        %437 = vmatpush2.msra.mxu0 0.0
        %438 = vmatprep.mubr.f32.mxu0 0.0
        %439 = vmatmul.mubr.f32.gmra.mxu0 %v301
        %v440 = vpop.f32.mrf.mxu0
        %v441 = vadd.f32 %v295, %v440
        %v442 = vpop.f32.mrf.mxu0
        %443 = vdwg.mxu0
        %444 = vmatprep.subr.mxu0 0.0
        %445 = vmatpush1.xpose.msra.mxu0 0.0
        %446 = vmatprep.subr.mxu0 0.0
        %447 = vmatpush1.xpose.msra.mxu0 0.0
        %448 = vmatprep.subr.mxu0 0.0
        %449 = vmatpush1.xpose.msra.mxu0 0.0
        %450 = vmatprep.subr.mxu0 0.0
        %451 = vmatpush1.xpose.msra.mxu0 0.0
        %452 = vmatprep.subr.mxu0 0.0
        %453 = vmatpush1.xpose.msra.mxu0 0.0
        %454 = vmatprep.subr.mxu0 0.0
        %455 = vmatpush1.xpose.msra.mxu0 0.0
        %456 = vmatprep.subr.mxu0 0.0
        %457 = vmatpush1.xpose.msra.mxu0 0.0
        %458 = vmatprep.subr.mxu0 0.0
        %459 = vmatpush1.xpose.msra.mxu0 0.0
        %460 = vmatprep.subr.mxu0 0.0
        %461 = vmatpush1.xpose.msra.mxu0 0.0
        %462 = vmatprep.subr.mxu0 0.0
        %463 = vmatpush1.xpose.msra.mxu0 0.0
        %464 = vmatprep.subr.mxu0 0.0
        %465 = vmatpush1.xpose.msra.mxu0 0.0
        %466 = vmatprep.subr.mxu0 0.0
        %467 = vmatpush1.xpose.msra.mxu0 0.0
        %468 = vmatprep.subr.mxu0 0.0
        %469 = vmatpush1.xpose.msra.mxu0 0.0
        %470 = vmatprep.subr.mxu0 0.0
        %471 = vmatpush1.xpose.msra.mxu0 0.0
        %472 = vmatprep.subr.mxu0 0.0
        %473 = vmatpush1.xpose.msra.mxu0 0.0
        %474 = vmatprep.subr.mxu0 0.0
        %475 = vmatpush1.xpose.msra.mxu0 %v372
        %476 = vmatprep.subr.mxu0 0.0
        %477 = vmatpush2.xpose.msra.mxu0 0.0
        %478 = vmatprep.subr.mxu0 0.0
        %479 = vmatpush2.xpose.msra.mxu0 0.0
        %480 = vmatprep.subr.mxu0 0.0
        %481 = vmatpush2.xpose.msra.mxu0 0.0
        %482 = vmatprep.subr.mxu0 0.0
        %483 = vmatpush2.xpose.msra.mxu0 0.0
        %484 = vmatprep.subr.mxu0 0.0
        %485 = vmatpush2.xpose.msra.mxu0 0.0
        %486 = vmatprep.subr.mxu0 0.0
        %487 = vmatpush2.xpose.msra.mxu0 0.0
        %488 = vmatprep.subr.mxu0 0.0
        %489 = vmatpush2.xpose.msra.mxu0 0.0
        %490 = vmatprep.subr.mxu0 0.0
        %491 = vmatpush2.xpose.msra.mxu0 0.0
        %492 = vmatprep.subr.mxu0 0.0
        %493 = vmatpush2.xpose.msra.mxu0 0.0
        %494 = vmatprep.subr.mxu0 0.0
        %495 = vmatpush2.xpose.msra.mxu0 0.0
        %496 = vmatprep.subr.mxu0 0.0
        %497 = vmatpush2.xpose.msra.mxu0 0.0
        %498 = vmatprep.subr.mxu0 0.0
        %499 = vmatpush2.xpose.msra.mxu0 0.0
        %500 = vmatprep.subr.mxu0 0.0
        %501 = vmatpush2.xpose.msra.mxu0 0.0
        %502 = vmatprep.subr.mxu0 0.0
        %503 = vmatpush2.xpose.msra.mxu0 0.0
        %504 = vmatprep.subr.mxu0 0.0
        %505 = vmatpush2.xpose.msra.mxu0 0.0
        %506 = vmatprep.subr.mxu0 0.0
        %507 = vmatpush2.xpose.msra.mxu0 0.0
        %508 = vmatprep.mubr.f32.mxu0 0.0
        %509 = vmatmul.mubr.f32.gmra.mxu0 %v370
        %v510 = vpop.f32.mrf.mxu0
        %v511 = vadd.f32 0.0, %v510
        %v512 = vpop.f32.mrf.mxu0
        %513 = vdwg.mxu0
        %vm514 = vcmask 64512
        %v515 = vsel %vm514, %v511, -inf
        %516 = vmax.xlane.f32.xlu0 %v515
        %v517 = vpop.xlane.xlu0 %516
        %v518 = vsub.f32 %v511, %v517
        %v519 = vmul.f32 %v518, 1.442695
        %v520 = vpow.pop %v519
        %v521 = vsel %vm514, %v520, 0.0
        %522 = vadd.xlane.f32.xlu0 %v521
        %v523 = vpop.xlane.xlu0 %522
        %v524 = vrcp.pop %v523
        %v525 = vmul.f32 %v520, %v524
        %v527 = vsel %vm514, %v525, 0
        %529 = vmatprep.subr.mxu0 0.0
        %530 = vmatpush1.msra.mxu0 0.0
        %531 = vmatprep.subr.mxu0 0.0
        %532 = vmatpush1.msra.mxu0 0.0
        %533 = vmatprep.subr.mxu0 0.0
        %534 = vmatpush1.msra.mxu0 0.0
        %535 = vmatprep.subr.mxu0 0.0
        %536 = vmatpush1.msra.mxu0 0.0
        %537 = vmatprep.subr.mxu0 0.0
        %538 = vmatpush1.msra.mxu0 0.0
        %539 = vmatprep.subr.mxu0 0.0
        %540 = vmatpush1.msra.mxu0 0.0
        %541 = vmatprep.subr.mxu0 0.0
        %542 = vmatpush1.msra.mxu0 0.0
        %543 = vmatprep.subr.mxu0 0.0
        %544 = vmatpush1.msra.mxu0 0.0
        %545 = vmatprep.subr.mxu0 0.0
        %546 = vmatpush1.msra.mxu0 0.0
        %547 = vmatprep.subr.mxu0 0.0
        %548 = vmatpush1.msra.mxu0 0.0
        %549 = vmatprep.subr.mxu0 0.0
        %550 = vmatpush1.msra.mxu0 0.0
        %551 = vmatprep.subr.mxu0 0.0
        %552 = vmatpush1.msra.mxu0 0.0
        %553 = vmatprep.subr.mxu0 0.0
        %554 = vmatpush1.msra.mxu0 0.0
        %555 = vmatprep.subr.mxu0 0.0
        %556 = vmatpush1.msra.mxu0 0.0
        %557 = vmatprep.subr.mxu0 0.0
        %558 = vmatpush1.msra.mxu0 0.0
        %559 = vmatprep.subr.mxu0 0.0
        %560 = vmatpush1.msra.mxu0 %v441
        %561 = vmatprep.subr.mxu0 0.0
        %562 = vmatpush2.msra.mxu0 0.0
        %563 = vmatprep.subr.mxu0 0.0
        %564 = vmatpush2.msra.mxu0 0.0
        %565 = vmatprep.subr.mxu0 0.0
        %566 = vmatpush2.msra.mxu0 0.0
        %567 = vmatprep.subr.mxu0 0.0
        %568 = vmatpush2.msra.mxu0 0.0
        %569 = vmatprep.subr.mxu0 0.0
        %570 = vmatpush2.msra.mxu0 0.0
        %571 = vmatprep.subr.mxu0 0.0
        %572 = vmatpush2.msra.mxu0 0.0
        %573 = vmatprep.subr.mxu0 0.0
        %574 = vmatpush2.msra.mxu0 0.0
        %575 = vmatprep.subr.mxu0 0.0
        %576 = vmatpush2.msra.mxu0 0.0
        %577 = vmatprep.subr.mxu0 0.0
        %578 = vmatpush2.msra.mxu0 0.0
        %579 = vmatprep.subr.mxu0 0.0
        %580 = vmatpush2.msra.mxu0 0.0
        %581 = vmatprep.subr.mxu0 0.0
        %582 = vmatpush2.msra.mxu0 0.0
        %583 = vmatprep.subr.mxu0 0.0
        %584 = vmatpush2.msra.mxu0 0.0
        %585 = vmatprep.subr.mxu0 0.0
        %586 = vmatpush2.msra.mxu0 0.0
        %587 = vmatprep.subr.mxu0 0.0
        %588 = vmatpush2.msra.mxu0 0.0
        %589 = vmatprep.subr.mxu0 0.0
        %590 = vmatpush2.msra.mxu0 0.0
        %591 = vmatprep.subr.mxu0 0.0
        %592 = vmatpush2.msra.mxu0 0.0
        %593 = vmatprep.mubr.f32.mxu0 0.0
        %594 = vmatmul.mubr.f32.gmra.mxu0 %v527
        %v595 = vpop.f32.mrf.mxu0
        %v596 = vadd.f32 0.0, %v595
        %v597 = vpop.f32.mrf.mxu0
        %598 = vdwg.mxu0
        %v599 = vld [vmem:[#allocation7] sm:$0xff]
        %v600 = vld [vmem:[#allocation7 + $0x8] sm:$0xff]
        %v601 = vld [vmem:[#allocation7 + $0x10] sm:$0xff]
        %v602 = vld [vmem:[#allocation7 + $0x18] sm:$0xff]
        %v603 = vld [vmem:[#allocation7 + $0x20] sm:$0xff]
        %v604 = vld [vmem:[#allocation7 + $0x28] sm:$0xff]
        %v605 = vld [vmem:[#allocation7 + $0x30] sm:$0xff]
        %v606 = vld [vmem:[#allocation7 + $0x38] sm:$0xff]
        %v607 = vld [vmem:[#allocation7 + $0x40] sm:$0xff]
        %v608 = vld [vmem:[#allocation7 + $0x48] sm:$0xff]
        %v609 = vld [vmem:[#allocation7 + $0x50] sm:$0xff]
        %v610 = vld [vmem:[#allocation7 + $0x58] sm:$0xff]
        %v611 = vld [vmem:[#allocation7 + $0x60] sm:$0xff]
        %v612 = vld [vmem:[#allocation7 + $0x68] sm:$0xff]
        %v613 = vld [vmem:[#allocation7 + $0x70] sm:$0xff]
        %v614 = vld [vmem:[#allocation7 + $0x78] sm:$0xff]
        %v615 = vld [vmem:[%s4] sm:$0x1]
        %v617 = vlaneseq
        %v618 = vshrl.u32 %v617, 7
        %v619 = vsub.s32 0, %v618
        %v620 = vrot.slane %v615, %v619
        %622 = vmatprep.subr.mxu0 0.0
        %623 = vmatpush1.msra.mxu0 %v614
        %624 = vmatprep.subr.mxu0 0.0
        %625 = vmatpush1.msra.mxu0 %v613
        %626 = vmatprep.subr.mxu0 0.0
        %627 = vmatpush1.msra.mxu0 %v612
        %628 = vmatprep.subr.mxu0 0.0
        %629 = vmatpush1.msra.mxu0 %v611
        %630 = vmatprep.subr.mxu0 0.0
        %631 = vmatpush1.msra.mxu0 %v610
        %632 = vmatprep.subr.mxu0 0.0
        %633 = vmatpush1.msra.mxu0 %v609
        %634 = vmatprep.subr.mxu0 0.0
        %635 = vmatpush1.msra.mxu0 %v608
        %636 = vmatprep.subr.mxu0 0.0
        %637 = vmatpush1.msra.mxu0 %v607
        %638 = vmatprep.subr.mxu0 0.0
        %639 = vmatpush1.msra.mxu0 %v606
        %640 = vmatprep.subr.mxu0 0.0
        %641 = vmatpush1.msra.mxu0 %v605
        %642 = vmatprep.subr.mxu0 0.0
        %643 = vmatpush1.msra.mxu0 %v604
        %644 = vmatprep.subr.mxu0 0.0
        %645 = vmatpush1.msra.mxu0 %v603
        %646 = vmatprep.subr.mxu0 0.0
        %647 = vmatpush1.msra.mxu0 %v602
        %648 = vmatprep.subr.mxu0 0.0
        %649 = vmatpush1.msra.mxu0 %v601
        %650 = vmatprep.subr.mxu0 0.0
        %651 = vmatpush1.msra.mxu0 %v600
        %652 = vmatprep.subr.mxu0 0.0
        %653 = vmatpush1.msra.mxu0 %v599
        %654 = vmatprep.subr.mxu0 0.0
        %655 = vmatpush2.msra.mxu0 0.0
        %656 = vmatprep.subr.mxu0 0.0
        %657 = vmatpush2.msra.mxu0 0.0
        %658 = vmatprep.subr.mxu0 0.0
        %659 = vmatpush2.msra.mxu0 0.0
        %660 = vmatprep.subr.mxu0 0.0
        %661 = vmatpush2.msra.mxu0 0.0
        %662 = vmatprep.subr.mxu0 0.0
        %663 = vmatpush2.msra.mxu0 0.0
        %664 = vmatprep.subr.mxu0 0.0
        %665 = vmatpush2.msra.mxu0 0.0
        %666 = vmatprep.subr.mxu0 0.0
        %667 = vmatpush2.msra.mxu0 0.0
        %668 = vmatprep.subr.mxu0 0.0
        %669 = vmatpush2.msra.mxu0 0.0
        %670 = vmatprep.subr.mxu0 0.0
        %671 = vmatpush2.msra.mxu0 0.0
        %672 = vmatprep.subr.mxu0 0.0
        %673 = vmatpush2.msra.mxu0 0.0
        %674 = vmatprep.subr.mxu0 0.0
        %675 = vmatpush2.msra.mxu0 0.0
        %676 = vmatprep.subr.mxu0 0.0
        %677 = vmatpush2.msra.mxu0 0.0
        %678 = vmatprep.subr.mxu0 0.0
        %679 = vmatpush2.msra.mxu0 0.0
        %680 = vmatprep.subr.mxu0 0.0
        %681 = vmatpush2.msra.mxu0 0.0
        %682 = vmatprep.subr.mxu0 0.0
        %683 = vmatpush2.msra.mxu0 0.0
        %684 = vmatprep.subr.mxu0 0.0
        %685 = vmatpush2.msra.mxu0 0.0
        %686 = vmatprep.mubr.f32.mxu0 0.0
        %687 = vmatmul.mubr.f32.gmra.mxu0 %v596
        %v688 = vpop.f32.mrf.mxu0
        %v689 = vadd.f32 %v620, %v688
        %v690 = vpop.f32.mrf.mxu0
        %691 = vdwg.mxu0
        %692 = vst [vmem:[%s268] sm:$0xff] %v689
        %s693 = sand.u32 %s141, 1
        %s694 = scalar_lea.sflag [#allocation4], %s693
        %s695 = sand.u32 %s141, 1
        %s696 = smul.addr %s695, 8
        %s697 = scalar_lea.vmem [#allocation8], %s696
        // Predicated region
        $region53: #{tpu_custom_call.1} parent=39 // pred_check
          %p698 = pneg %p151
        $region54: #{tpu_custom_call.1} parent=39 // pred_check_branch
          %700 = sbr.rel (%p698) target = $region56
        $region55: #{tpu_custom_call.1} parent=39 // pred_region
          %s702 = ssub.s32 128, 128
          %703 = vsyncadd %s694, %s702
          %s704 = smul.addr %s23, 128
          %s705 = scalar_lea.hbm %s5, %s704
          %s707 = sshll.u32 %s697, 4
          %s708 = int_to_ptr.vmem [resolvable:$true] %s707
          %710 = dma.vmem_to_hbm [thread:$0]  %s708, 128, %s705, %s694
        $region56: #{tpu_custom_call.1} parent=39 // pred_fallthru
          _
      $region40: #{tpu_custom_call.1} parent=5 // pred_fallthru
        _
      %p711 = scmp.le.s32.totalorder 2, %s18
      // Predicated region
      $region57: #{tpu_custom_call.1} parent=5 // pred_check
        %p712 = pneg %p711
      $region58: #{tpu_custom_call.1} parent=5 // pred_check_branch
        %714 = sbr.rel (%p712) target = $region60
      $region59: #{tpu_custom_call.1} parent=5 // pred_region
        %s715 = ssub.s32 %s18, 2
        // Predicated region
        $region61: #{tpu_custom_call.1} parent=59 // pred_check
          %p716 = pneg %p157
        $region62: #{tpu_custom_call.1} parent=59 // pred_check_branch
          %718 = sbr.rel (%p716) target = $region64
        $region63: #{tpu_custom_call.1} parent=59 // pred_region
          %s719 = sand.u32 %s142, 1
          %s720 = scalar_lea.sflag [#allocation4], %s719
          %s721 = sand.u32 %s142, 1
          %s722 = smul.addr %s721, 8
          %s723 = scalar_lea.vmem [#allocation8], %s722
          %724 = dma.done %s720, 128
        $region64: #{tpu_custom_call.1} parent=59 // pred_fallthru
          _
      $region60: #{tpu_custom_call.1} parent=5 // pred_fallthru
        _
    $region6: #{tpu_custom_call.1} parent=1 // loop_footer
      %s22 = sadd.s32 1, %s18
    $region7: #{tpu_custom_call.1} parent=1 // loop_footer_branch
      %17 = sbr.rel target = $region3
    $region8: #{tpu_custom_call.1} parent=1 // loop_exit
      _
    %725 = vsyncpa [#allocation3], 1
    %s726 = scalar_lea.sflag [#allocation3], 1
    %727 = vsyncpa %s726, 1
    %728 = vsyncpa [#allocation6], 1
    %729 = vsyncpa [#allocation4], 1
    %s730 = scalar_lea.sflag [#allocation4], 1
    %731 = vsyncpa %s730, 1

</llo_original>
